<compile_context>
chip_gen: v5e
topology: v5e:2x2
jax: 0.10.0
libtpu: 0.0.40
codegen_flags: <defaults>
</compile_context>

<pallas_src>
import jax
import jax.numpy as jnp
from jax.experimental import pallas as pl
from jax.experimental.pallas import tpu as pltpu

EPS = 1e-5
MOMENTUM = 0.01
_MAX_BLOCK_BYTES = 4 * 1024 * 1024  # per-block budget (v7x-safe VMEM sizing)


def _pick_tile_hw(hw, c, itemsize):
    """Largest multiple-of-128 divisor of hw whose (1, C, tile) block fits budget."""
    if hw % 128 != 0:
        return hw  # full-dim block is always legal
    cap = max(128, (_MAX_BLOCK_BYTES // max(1, c * itemsize)) // 128 * 128)
    tile = 128
    t = 128
    while t <= min(hw, cap):
        if hw % t == 0:
            tile = t
        t += 128
    return tile


def _make_stats_kernel(total_count):
    inv_count = 1.0 / float(total_count)

    def kernel(x_ref, w_ref, b_ref, rm_ref, rv_ref,
               scale_ref, shift_ref, nrm_ref, nrv_ref,
               sum_acc, sq_acc):
        n_i = pl.program_id(0)
        t_i = pl.program_id(1)

        @pl.when(jnp.logical_and(n_i == 0, t_i == 0))
        def _init():
            sum_acc[...] = jnp.zeros_like(sum_acc)
            sq_acc[...] = jnp.zeros_like(sq_acc)

        # (C, TILE) tile; hot loop is VPU adds only (stats accumulated in f32)
        xf = x_ref[0].astype(jnp.float32)
        sum_acc[...] += xf
        sq_acc[...] += xf * xf

        is_last = jnp.logical_and(n_i == pl.num_programs(0) - 1,
                                  t_i == pl.num_programs(1) - 1)

        @pl.when(is_last)
        def _finalize():
            # one narrow cross-lane (XLU) reduce per channel, once per kernel
            mean = jnp.sum(sum_acc[...], axis=-1, keepdims=True) * inv_count
            ex2 = jnp.sum(sq_acc[...], axis=-1, keepdims=True) * inv_count
            var = ex2 - mean * mean                      # biased variance
            inv_std = jax.lax.rsqrt(var + EPS)
            scale = w_ref[...] * inv_std
            scale_ref[...] = scale
            shift_ref[...] = b_ref[...] - mean * scale
            # running-stat update exactly as the reference module writes it
            nrm_ref[...] = (1.0 - MOMENTUM) * mean + MOMENTUM * rm_ref[...]
            nrv_ref[...] = (1.0 - MOMENTUM) * var + MOMENTUM * rv_ref[...]

    return kernel


def _apply_kernel(x_ref, scale_ref, shift_ref, o_ref):
    # single FMA per element: out = x * scale + shift (no full-size temporaries)
    x = x_ref[...].astype(jnp.float32)      # (1, C, TILE)
    scale = scale_ref[...][None]            # (1, C, 1)
    shift = shift_ref[...][None]
    o_ref[...] = (x * scale + shift).astype(o_ref.dtype)


def batchnorm2d_train(x_nchw, weight, bias, running_mean, running_var):
    """Training-mode BatchNorm2d forward. x_nchw: (N, C, H, W)."""
    N, C, H, W = x_nchw.shape
    HW = H * W
    tile = _pick_tile_hw(HW, C, jnp.dtype(x_nchw.dtype).itemsize)
    n_tiles = HW // tile

    # Free view (no transpose, no extra HBM pass): (N, C, H*W)
    x3 = x_nchw.reshape(N, C, HW)
    w2 = weight.reshape(C, 1).astype(jnp.float32)
    b2 = bias.reshape(C, 1).astype(jnp.float32)
    rm2 = running_mean.reshape(C, 1).astype(jnp.float32)
    rv2 = running_var.reshape(C, 1).astype(jnp.float32)

    x_spec = pl.BlockSpec((1, C, tile), lambda n, t: (n, 0, t))
    c_spec = pl.BlockSpec((C, 1), lambda n, t: (0, 0))
    c_shape = jax.ShapeDtypeStruct((C, 1), jnp.float32)

    # ---- pass 1: per-channel statistics -> scale/shift + running stats ----
    scale, shift, new_rm, new_rv = pl.pallas_call(
        _make_stats_kernel(N * HW),
        grid=(N, n_tiles),
        in_specs=[x_spec, c_spec, c_spec, c_spec, c_spec],
        out_specs=(c_spec, c_spec, c_spec, c_spec),
        out_shape=(c_shape, c_shape, c_shape, c_shape),
        scratch_shapes=[pltpu.VMEM((C, tile), jnp.float32),
                        pltpu.VMEM((C, tile), jnp.float32)],
        compiler_params=pltpu.CompilerParams(
            dimension_semantics=("arbitrary", "arbitrary")),
    )(x3, w2, b2, rm2, rv2)

    # ---- pass 2: fully parallel normalize (single FMA per element) ----
    out3 = pl.pallas_call(
        _apply_kernel,
        grid=(N, n_tiles),
        in_specs=[x_spec, c_spec, c_spec],
        out_specs=x_spec,
        out_shape=jax.ShapeDtypeStruct((N, C, HW), x_nchw.dtype),
        compiler_params=pltpu.CompilerParams(
            dimension_semantics=("parallel", "parallel")),
    )(x3, scale, shift)

    return out3.reshape(N, C, H, W), new_rm.reshape(C), new_rv.reshape(C)


def batchnorm2d_ref(x, weight, bias, running_mean, running_var):
    """Pure-JAX reference mirroring the PyTorch training-mode forward."""
    x = x.astype(jnp.float32)
    mean = jnp.mean(x, axis=(0, 2, 3))
    var = jnp.var(x, axis=(0, 2, 3))  # biased
    new_rm = (1.0 - MOMENTUM) * mean + MOMENTUM * running_mean
    new_rv = (1.0 - MOMENTUM) * var + MOMENTUM * running_var
    bn = (x - mean[None, :, None, None]) / jnp.sqrt(var[None, :, None, None] + EPS)
    out = weight[None, :, None, None] * bn + bias[None, :, None, None]
    return out, new_rm, new_rv


if __name__ == "__main__":
    key = jax.random.PRNGKey(0)
    N, C, H, W = 2, 4, 16, 16

    x = jax.random.normal(key, (N, C, H, W), dtype=jnp.float32) * 2.0 + 0.5

    # deterministic parameter init matching the module's __init__
    weight = jnp.ones((C,), dtype=jnp.float32)
    bias = jnp.zeros((C,), dtype=jnp.float32)
    running_mean = jnp.zeros((C,), dtype=jnp.float32)
    running_var = jnp.ones((C,), dtype=jnp.float32)

    out, new_rm, new_rv = batchnorm2d_train(x, weight, bias,
                                            running_mean, running_var)
    jax.block_until_ready((out, new_rm, new_rv))

    ref_out, ref_rm, ref_rv = batchnorm2d_ref(x, weight, bias,
                                              running_mean, running_var)

    assert out.shape == (N, C, H, W)
    assert jnp.allclose(out, ref_out, atol=1e-5, rtol=1e-5)
    assert jnp.allclose(new_rm, ref_rm, atol=1e-5, rtol=1e-5)
    assert jnp.allclose(new_rv, ref_rv, atol=1e-5, rtol=1e-5)

    print("KERNEL_OK")
</pallas_src>

<mosaic_0001>
module attributes {stable_mosaic.version = 11 : i64} {
  func.func @kernel(%arg0: i32, %arg1: i32, %arg2: memref<1x4x256xf32, #tpu.memory_space<vmem>>, %arg3: memref<4x1xf32, #tpu.memory_space<vmem>>, %arg4: memref<4x1xf32, #tpu.memory_space<vmem>>, %arg5: memref<4x1xf32, #tpu.memory_space<vmem>>, %arg6: memref<4x1xf32, #tpu.memory_space<vmem>>, %arg7: memref<4x1xf32, #tpu.memory_space<vmem>>, %arg8: memref<4x1xf32, #tpu.memory_space<vmem>>, %arg9: memref<4x1xf32, #tpu.memory_space<vmem>>, %arg10: memref<4x1xf32, #tpu.memory_space<vmem>>, %arg11: memref<4x256xf32, #tpu.memory_space<vmem>>, %arg12: memref<4x256xf32, #tpu.memory_space<vmem>>) attributes {dimension_semantics = [#tpu.dimension_semantics<arbitrary>, #tpu.dimension_semantics<arbitrary>], iteration_bounds = array<i64: 2, 1>, scalar_prefetch = 0 : i64, scratch_operands = 2 : i64, tpu.core_type = #tpu.core_type<tc>, window_params = [{transform_indices = @transform_0, window_bounds = array<i64: 1, 4, 256>}, {pipeline_mode = #tpu.pipeline_mode<synchronous>, transform_indices = @transform_1, window_bounds = array<i64: 4, 1>}, {pipeline_mode = #tpu.pipeline_mode<synchronous>, transform_indices = @transform_2, window_bounds = array<i64: 4, 1>}, {pipeline_mode = #tpu.pipeline_mode<synchronous>, transform_indices = @transform_3, window_bounds = array<i64: 4, 1>}, {pipeline_mode = #tpu.pipeline_mode<synchronous>, transform_indices = @transform_4, window_bounds = array<i64: 4, 1>}, {pipeline_mode = #tpu.pipeline_mode<synchronous>, transform_indices = @transform_5, window_bounds = array<i64: 4, 1>}, {pipeline_mode = #tpu.pipeline_mode<synchronous>, transform_indices = @transform_6, window_bounds = array<i64: 4, 1>}, {pipeline_mode = #tpu.pipeline_mode<synchronous>, transform_indices = @transform_7, window_bounds = array<i64: 4, 1>}, {pipeline_mode = #tpu.pipeline_mode<synchronous>, transform_indices = @transform_8, window_bounds = array<i64: 4, 1>}]} {
    %c0_i32 = arith.constant 0 : i32
    %0 = arith.cmpi eq, %arg0, %c0_i32 : i32
    %c0_i32_0 = arith.constant 0 : i32
    %1 = arith.cmpi eq, %arg1, %c0_i32_0 : i32
    %2 = arith.andi %0, %1 : i1
    %3 = arith.extui %2 : i1 to i32
    %c0_i32_1 = arith.constant 0 : i32
    %4 = arith.cmpi ne, %3, %c0_i32_1 : i32
    scf.if %4 {
      %cst = arith.constant 0.000000e+00 : f32
      %19 = vector.broadcast %cst : f32 to vector<4x256xf32>
      %c0_14 = arith.constant 0 : index
      %c0_15 = arith.constant 0 : index
      %20 = vector.load %arg11[%c0_14, %c0_15] : memref<4x256xf32, #tpu.memory_space<vmem>>, vector<4x256xf32>
      tpu.vector_store %arg11[%c0_14, %c0_15], %19 {strides = array<i32>} : memref<4x256xf32, #tpu.memory_space<vmem>>, vector<4x256xf32>,
      %cst_16 = arith.constant 0.000000e+00 : f32
      %21 = vector.broadcast %cst_16 : f32 to vector<4x256xf32>
      %c0_17 = arith.constant 0 : index
      %c0_18 = arith.constant 0 : index
      %22 = vector.load %arg12[%c0_17, %c0_18] : memref<4x256xf32, #tpu.memory_space<vmem>>, vector<4x256xf32>
      tpu.vector_store %arg12[%c0_17, %c0_18], %21 {strides = array<i32>} : memref<4x256xf32, #tpu.memory_space<vmem>>, vector<4x256xf32>,
    } else {
    }
    %c0 = arith.constant 0 : index
    %c0_2 = arith.constant 0 : index
    %c0_3 = arith.constant 0 : index
    %5 = vector.load %arg2[%c0, %c0_2, %c0_3] : memref<1x4x256xf32, #tpu.memory_space<vmem>>, vector<1x4x256xf32>
    %6 = vector.shape_cast %5 : vector<1x4x256xf32> to vector<4x256xf32>
    %c0_4 = arith.constant 0 : index
    %c0_5 = arith.constant 0 : index
    %7 = vector.load %arg11[%c0_4, %c0_5] : memref<4x256xf32, #tpu.memory_space<vmem>>, vector<4x256xf32>
    %8 = arith.addf %7, %6 : vector<4x256xf32>
    %c0_6 = arith.constant 0 : index
    %c0_7 = arith.constant 0 : index
    %9 = vector.load %arg11[%c0_6, %c0_7] : memref<4x256xf32, #tpu.memory_space<vmem>>, vector<4x256xf32>
    tpu.vector_store %arg11[%c0_6, %c0_7], %8 {strides = array<i32>} : memref<4x256xf32, #tpu.memory_space<vmem>>, vector<4x256xf32>,
    %c0_8 = arith.constant 0 : index
    %c0_9 = arith.constant 0 : index
    %10 = vector.load %arg12[%c0_8, %c0_9] : memref<4x256xf32, #tpu.memory_space<vmem>>, vector<4x256xf32>
    %11 = arith.mulf %6, %6 : vector<4x256xf32>
    %12 = arith.addf %10, %11 : vector<4x256xf32>
    %c0_10 = arith.constant 0 : index
    %c0_11 = arith.constant 0 : index
    %13 = vector.load %arg12[%c0_10, %c0_11] : memref<4x256xf32, #tpu.memory_space<vmem>>, vector<4x256xf32>
    tpu.vector_store %arg12[%c0_10, %c0_11], %12 {strides = array<i32>} : memref<4x256xf32, #tpu.memory_space<vmem>>, vector<4x256xf32>,
    %c1_i32 = arith.constant 1 : i32
    %14 = arith.cmpi eq, %arg0, %c1_i32 : i32
    %c0_i32_12 = arith.constant 0 : i32
    %15 = arith.cmpi eq, %arg1, %c0_i32_12 : i32
    %16 = arith.andi %14, %15 : i1
    %17 = arith.extui %16 : i1 to i32
    %c0_i32_13 = arith.constant 0 : i32
    %18 = arith.cmpi ne, %17, %c0_i32_13 : i32
    scf.if %18 {
      %c0_14 = arith.constant 0 : index
      %c0_15 = arith.constant 0 : index
      %19 = vector.load %arg11[%c0_14, %c0_15] : memref<4x256xf32, #tpu.memory_space<vmem>>, vector<4x256xf32>
      %cst = arith.constant dense<0.000000e+00> : vector<4xf32>
      %20 = vector.multi_reduction <add>, %19, %cst [1] : vector<4x256xf32> to vector<4xf32>
      %21 = vector.shape_cast %20 : vector<4xf32> to vector<4x1xf32>
      %cst_16 = arith.constant 0.001953125 : f32
      %22 = vector.broadcast %cst_16 : f32 to vector<4x1xf32>
      %23 = arith.mulf %21, %22 : vector<4x1xf32>
      %c0_17 = arith.constant 0 : index
      %c0_18 = arith.constant 0 : index
      %24 = vector.load %arg12[%c0_17, %c0_18] : memref<4x256xf32, #tpu.memory_space<vmem>>, vector<4x256xf32>
      %cst_19 = arith.constant dense<0.000000e+00> : vector<4xf32>
      %25 = vector.multi_reduction <add>, %24, %cst_19 [1] : vector<4x256xf32> to vector<4xf32>
      %26 = vector.shape_cast %25 : vector<4xf32> to vector<4x1xf32>
      %cst_20 = arith.constant 0.001953125 : f32
      %27 = vector.broadcast %cst_20 : f32 to vector<4x1xf32>
      %28 = arith.mulf %26, %27 : vector<4x1xf32>
      %29 = arith.mulf %23, %23 : vector<4x1xf32>
      %30 = arith.subf %28, %29 : vector<4x1xf32>
      %cst_21 = arith.constant 9.99999974E-6 : f32
      %31 = vector.broadcast %cst_21 : f32 to vector<4x1xf32>
      %32 = arith.addf %30, %31 : vector<4x1xf32>
      %33 = math.rsqrt %32 : vector<4x1xf32>
      %c0_22 = arith.constant 0 : index
      %c0_23 = arith.constant 0 : index
      %34 = vector.load %arg3[%c0_22, %c0_23] : memref<4x1xf32, #tpu.memory_space<vmem>>, vector<4x1xf32>
      %35 = arith.mulf %34, %33 : vector<4x1xf32>
      %c0_24 = arith.constant 0 : index
      %c0_25 = arith.constant 0 : index
      %36 = vector.load %arg7[%c0_24, %c0_25] : memref<4x1xf32, #tpu.memory_space<vmem>>, vector<4x1xf32>
      tpu.vector_store %arg7[%c0_24, %c0_25], %35 {strides = array<i32>} : memref<4x1xf32, #tpu.memory_space<vmem>>, vector<4x1xf32>,
      %c0_26 = arith.constant 0 : index
      %c0_27 = arith.constant 0 : index
      %37 = vector.load %arg4[%c0_26, %c0_27] : memref<4x1xf32, #tpu.memory_space<vmem>>, vector<4x1xf32>
      %38 = arith.mulf %23, %35 : vector<4x1xf32>
      %39 = arith.subf %37, %38 : vector<4x1xf32>
      %c0_28 = arith.constant 0 : index
      %c0_29 = arith.constant 0 : index
      %40 = vector.load %arg8[%c0_28, %c0_29] : memref<4x1xf32, #tpu.memory_space<vmem>>, vector<4x1xf32>
      tpu.vector_store %arg8[%c0_28, %c0_29], %39 {strides = array<i32>} : memref<4x1xf32, #tpu.memory_space<vmem>>, vector<4x1xf32>,
      %cst_30 = arith.constant 9.900000e-01 : f32
      %41 = vector.broadcast %cst_30 : f32 to vector<4x1xf32>
      %42 = arith.mulf %41, %23 : vector<4x1xf32>
      %c0_31 = arith.constant 0 : index
      %c0_32 = arith.constant 0 : index
      %43 = vector.load %arg5[%c0_31, %c0_32] : memref<4x1xf32, #tpu.memory_space<vmem>>, vector<4x1xf32>
      %cst_33 = arith.constant 0.00999999977 : f32
      %44 = vector.broadcast %cst_33 : f32 to vector<4x1xf32>
      %45 = arith.mulf %44, %43 : vector<4x1xf32>
      %46 = arith.addf %42, %45 : vector<4x1xf32>
      %c0_34 = arith.constant 0 : index
      %c0_35 = arith.constant 0 : index
      %47 = vector.load %arg9[%c0_34, %c0_35] : memref<4x1xf32, #tpu.memory_space<vmem>>, vector<4x1xf32>
      tpu.vector_store %arg9[%c0_34, %c0_35], %46 {strides = array<i32>} : memref<4x1xf32, #tpu.memory_space<vmem>>, vector<4x1xf32>,
      %cst_36 = arith.constant 9.900000e-01 : f32
      %48 = vector.broadcast %cst_36 : f32 to vector<4x1xf32>
      %49 = arith.mulf %48, %30 : vector<4x1xf32>
      %c0_37 = arith.constant 0 : index
      %c0_38 = arith.constant 0 : index
      %50 = vector.load %arg6[%c0_37, %c0_38] : memref<4x1xf32, #tpu.memory_space<vmem>>, vector<4x1xf32>
      %cst_39 = arith.constant 0.00999999977 : f32
      %51 = vector.broadcast %cst_39 : f32 to vector<4x1xf32>
      %52 = arith.mulf %51, %50 : vector<4x1xf32>
      %53 = arith.addf %49, %52 : vector<4x1xf32>
      %c0_40 = arith.constant 0 : index
      %c0_41 = arith.constant 0 : index
      %54 = vector.load %arg10[%c0_40, %c0_41] : memref<4x1xf32, #tpu.memory_space<vmem>>, vector<4x1xf32>
      tpu.vector_store %arg10[%c0_40, %c0_41], %53 {strides = array<i32>} : memref<4x1xf32, #tpu.memory_space<vmem>>, vector<4x1xf32>,
    } else {
    }
    return
  }
  func.func @transform_0(%arg0: i32, %arg1: i32) -> (i32, i32, i32) {
    %c0_i32 = arith.constant 0 : i32
    %c0_i32_0 = arith.constant 0 : i32
    return %arg0, %c0_i32, %arg1 : i32, i32, i32
  }
  func.func @transform_1(%arg0: i32, %arg1: i32) -> (i32, i32) {
    %c0_i32 = arith.constant 0 : i32
    %c0_i32_0 = arith.constant 0 : i32
    %c0_i32_1 = arith.constant 0 : i32
    return %c0_i32, %c0_i32_0 : i32, i32
  }
  func.func @transform_2(%arg0: i32, %arg1: i32) -> (i32, i32) {
    %c0_i32 = arith.constant 0 : i32
    %c0_i32_0 = arith.constant 0 : i32
    %c0_i32_1 = arith.constant 0 : i32
    return %c0_i32, %c0_i32_0 : i32, i32
  }
  func.func @transform_3(%arg0: i32, %arg1: i32) -> (i32, i32) {
    %c0_i32 = arith.constant 0 : i32
    %c0_i32_0 = arith.constant 0 : i32
    %c0_i32_1 = arith.constant 0 : i32
    return %c0_i32, %c0_i32_0 : i32, i32
  }
  func.func @transform_4(%arg0: i32, %arg1: i32) -> (i32, i32) {
    %c0_i32 = arith.constant 0 : i32
    %c0_i32_0 = arith.constant 0 : i32
    %c0_i32_1 = arith.constant 0 : i32
    return %c0_i32, %c0_i32_0 : i32, i32
  }
  func.func @transform_5(%arg0: i32, %arg1: i32) -> (i32, i32) {
    %c0_i32 = arith.constant 0 : i32
    %c0_i32_0 = arith.constant 0 : i32
    %c0_i32_1 = arith.constant 0 : i32
    return %c0_i32, %c0_i32_0 : i32, i32
  }
  func.func @transform_6(%arg0: i32, %arg1: i32) -> (i32, i32) {
    %c0_i32 = arith.constant 0 : i32
    %c0_i32_0 = arith.constant 0 : i32
    %c0_i32_1 = arith.constant 0 : i32
    return %c0_i32, %c0_i32_0 : i32, i32
  }
  func.func @transform_7(%arg0: i32, %arg1: i32) -> (i32, i32) {
    %c0_i32 = arith.constant 0 : i32
    %c0_i32_0 = arith.constant 0 : i32
    %c0_i32_1 = arith.constant 0 : i32
    return %c0_i32, %c0_i32_0 : i32, i32
  }
  func.func @transform_8(%arg0: i32, %arg1: i32) -> (i32, i32) {
    %c0_i32 = arith.constant 0 : i32
    %c0_i32_0 = arith.constant 0 : i32
    %c0_i32_1 = arith.constant 0 : i32
    return %c0_i32, %c0_i32_0 : i32, i32
  }
}

</mosaic_0001>

<llo_original>
// kernel: tpu_custom_call.1
$region0: #{tpu_custom_call.1}
  #allocation0 [shape = 'u32[]', space=smem, size = 0x4, offset = 0x4, fixed_abs, tag = 'smem constant byte address 0x4 - core index']
  #allocation1 [shape = 'u32[72,128]{1,0:T(1,128)}', space=vmem, size = 0x9000, scoped, tag = 'internal scratch']
  #allocation2 [shape = 'f32[4,256]{1,0:T(4,128)}', space=vmem, size = 0x1000, scoped, tag = 'scratch operand']
  #allocation3 [shape = 'f32[4,256]{1,0:T(4,128)}', space=vmem, size = 0x1000, scoped, tag = 'scratch operand']
  %s0 = inlined_call_operand.hbm [shape: f32[2,4,256], index: 0, kind: input, shape index: {}]
  %s1 = inlined_call_operand.vmem [shape: f32[4,1], index: 1, kind: input, shape index: {}]
  %s2 = inlined_call_operand.vmem [shape: f32[4,1], index: 2, kind: input, shape index: {}]
  %s3 = inlined_call_operand.vmem [shape: f32[4,1], index: 3, kind: input, shape index: {}]
  %s4 = inlined_call_operand.vmem [shape: f32[4,1], index: 4, kind: input, shape index: {}]
  %s5 = inlined_call_operand.vmem [shape: f32[4,1], index: 5, kind: output, shape index: {0}]
  %s6 = inlined_call_operand.vmem [shape: f32[4,1], index: 6, kind: output, shape index: {1}]
  %s7 = inlined_call_operand.vmem [shape: f32[4,1], index: 7, kind: output, shape index: {2}]
  %s8 = inlined_call_operand.vmem [shape: f32[4,1], index: 8, kind: output, shape index: {3}]
  %9 = xla_tuple %s5, %s6, %s7, %s8
  %s10 = sld [smem:[#allocation0]]
  $region89: #{tpu_custom_call.1} parent=0
    _
  %s12 = ssub.s32 1, %s10
  %s13 = scalar_select 0, %s12, %s10
  $region1: #{tpu_custom_call.1} parent=0
    #allocation4 [shape = 'u8[8192]{0}', space=vmem, size = 0x2000, scoped, tag = 'input window, operand 0']
    #allocation5 [shape = 's32[2]{0}', space=sflag, size = 0x8, scoped, tag = 'scoped memory for tpu_custom_call.1']
    %14 = vsyncpa [#allocation5], 0
    %s15 = scalar_lea.sflag [#allocation5], 1
    %16 = vsyncpa %s15, 0
    loop: start=0, step=1, limit=4
    $region2: #{tpu_custom_call.1} parent=1 // loop_pre_header
      _
    $region3: #{tpu_custom_call.1} parent=1 // loop_header
      %s18 = sphi 0, %s22
      %p19 = scmp.ge.s32.totalorder %s18, 4
      %s25 = sphi 0, %s37
      %s26 = sphi 0, %s33
      %s27 = sphi 0, %s25
      %s28 = sphi 0, %s26
      %s29 = sphi 0, %s27
      %s30 = sphi 0, %s28
      %s42 = sphi 0, %s44
      %s45 = sphi 0, %s42
      %s46 = sphi 0, %s45
      %s62 = sphi 0, %s46
      %s66 = sphi 0, %s66
      %s68 = sphi 0, %s66
      %s69 = sphi 0, %s68
      %s83 = sphi 0, %s69
      %s87 = sphi 0, %s87
      %s89 = sphi 0, %s87
      %s90 = sphi 0, %s89
      %s104 = sphi 0, %s90
      %s108 = sphi 0, %s108
      %s110 = sphi 0, %s108
      %s111 = sphi 0, %s110
      %s125 = sphi 0, %s111
      %s129 = sphi 0, %s129
      %s131 = sphi 0, %s129
      %s132 = sphi 0, %s131
      %s146 = sphi 0, %s132
      %s150 = sphi 0, %s150
      %s152 = sphi 0, %s150
      %s153 = sphi 0, %s152
      %s167 = sphi 0, %s153
      %s171 = sphi 0, %s171
      %s173 = sphi 0, %s171
      %s174 = sphi 0, %s173
      %s188 = sphi 0, %s174
      %s192 = sphi 0, %s192
      %s194 = sphi 0, %s192
      %s195 = sphi 0, %s194
      %s209 = sphi 0, %s195
      %s213 = sphi 0, %s213
      %s215 = sphi 0, %s213
      %s216 = sphi 0, %s215
      %s230 = sphi 0, %s216
    $region4: #{tpu_custom_call.1} parent=1 // loop_header_branch
      %21 = sbr.rel (%p19) target = $region8
    $region5: #{tpu_custom_call.1} parent=1 // loop_body
      %s23 = ssub.s32 %s18, 1
      %s24 = ssub.s32 %s18, 2
      %s31 = sadd.s32 1, %s26
      %p32 = scmp.ge.s32.totalorder %s31, 1
      %s33 = scalar_select %p32, 0, %s31
      %s34 = sadd.s32 1, %s25
      %s35 = scalar_select %p32, %s34, %s25
      %p36 = scmp.ge.s32.totalorder %s35, 2
      %s37 = scalar_select %p36, 0, %s35
      %s38 = ssub.s32 %s25, %s37
      %s39 = ssub.s32 %s26, %s33
      %s40 = sor.u32 %s38, %s39
      %p41 = scmp.eq.s32.totalorder %s40, 0
      %s43 = sadd.s32 %s42, 1
      %s44 = scalar_select %p41, %s42, %s43
      %p47 = pneg %p41
      %p48 = scmp.eq.s32.totalorder %s18, 1
      %p49 = por %p47, %p48
      %p50 = scmp.ne.s32.totalorder %s42, %s45
      %p51 = scmp.eq.s32.totalorder %s18, 0
      %p52 = por %p50, %p51
      %p53 = scmp.ne.s32.totalorder %s42, %s45
      %p54 = scmp.eq.s32.totalorder %s23, 1
      %p55 = por %p53, %p54
      %p56 = scmp.ne.s32.totalorder %s45, %s46
      %p57 = scmp.eq.s32.totalorder %s23, 0
      %p58 = por %p56, %p57
      %p59 = scmp.ne.s32.totalorder %s45, %s46
      %p60 = scmp.eq.s32.totalorder %s24, 1
      %p61 = por %p59, %p60
      %p63 = scmp.ne.s32.totalorder %s46, %s62
      %p64 = scmp.eq.s32.totalorder %s24, 0
      %p65 = por %p63, %p64
      %s67 = sadd.s32 %s66, 1
      %p70 = scmp.eq.s32.totalorder %s18, 1
      %p71 = scmp.ne.s32.totalorder %s66, %s68
      %p72 = scmp.eq.s32.totalorder %s18, 0
      %p73 = por %p71, %p72
      %p74 = scmp.ne.s32.totalorder %s66, %s68
      %p75 = scmp.eq.s32.totalorder %s23, 1
      %p76 = por %p74, %p75
      %p77 = scmp.ne.s32.totalorder %s68, %s69
      %p78 = scmp.eq.s32.totalorder %s23, 0
      %p79 = por %p77, %p78
      %p80 = scmp.ne.s32.totalorder %s68, %s69
      %p81 = scmp.eq.s32.totalorder %s24, 1
      %p82 = por %p80, %p81
      %p84 = scmp.ne.s32.totalorder %s69, %s83
      %p85 = scmp.eq.s32.totalorder %s24, 0
      %p86 = por %p84, %p85
      %s88 = sadd.s32 %s87, 1
      %p91 = scmp.eq.s32.totalorder %s18, 1
      %p92 = scmp.ne.s32.totalorder %s87, %s89
      %p93 = scmp.eq.s32.totalorder %s18, 0
      %p94 = por %p92, %p93
      %p95 = scmp.ne.s32.totalorder %s87, %s89
      %p96 = scmp.eq.s32.totalorder %s23, 1
      %p97 = por %p95, %p96
      %p98 = scmp.ne.s32.totalorder %s89, %s90
      %p99 = scmp.eq.s32.totalorder %s23, 0
      %p100 = por %p98, %p99
      %p101 = scmp.ne.s32.totalorder %s89, %s90
      %p102 = scmp.eq.s32.totalorder %s24, 1
      %p103 = por %p101, %p102
      %p105 = scmp.ne.s32.totalorder %s90, %s104
      %p106 = scmp.eq.s32.totalorder %s24, 0
      %p107 = por %p105, %p106
      %s109 = sadd.s32 %s108, 1
      %p112 = scmp.eq.s32.totalorder %s18, 1
      %p113 = scmp.ne.s32.totalorder %s108, %s110
      %p114 = scmp.eq.s32.totalorder %s18, 0
      %p115 = por %p113, %p114
      %p116 = scmp.ne.s32.totalorder %s108, %s110
      %p117 = scmp.eq.s32.totalorder %s23, 1
      %p118 = por %p116, %p117
      %p119 = scmp.ne.s32.totalorder %s110, %s111
      %p120 = scmp.eq.s32.totalorder %s23, 0
      %p121 = por %p119, %p120
      %p122 = scmp.ne.s32.totalorder %s110, %s111
      %p123 = scmp.eq.s32.totalorder %s24, 1
      %p124 = por %p122, %p123
      %p126 = scmp.ne.s32.totalorder %s111, %s125
      %p127 = scmp.eq.s32.totalorder %s24, 0
      %p128 = por %p126, %p127
      %s130 = sadd.s32 %s129, 1
      %p133 = scmp.eq.s32.totalorder %s18, 1
      %p134 = scmp.ne.s32.totalorder %s129, %s131
      %p135 = scmp.eq.s32.totalorder %s18, 0
      %p136 = por %p134, %p135
      %p137 = scmp.ne.s32.totalorder %s129, %s131
      %p138 = scmp.eq.s32.totalorder %s23, 1
      %p139 = por %p137, %p138
      %p140 = scmp.ne.s32.totalorder %s131, %s132
      %p141 = scmp.eq.s32.totalorder %s23, 0
      %p142 = por %p140, %p141
      %p143 = scmp.ne.s32.totalorder %s131, %s132
      %p144 = scmp.eq.s32.totalorder %s24, 1
      %p145 = por %p143, %p144
      %p147 = scmp.ne.s32.totalorder %s132, %s146
      %p148 = scmp.eq.s32.totalorder %s24, 0
      %p149 = por %p147, %p148
      %s151 = sadd.s32 %s150, 1
      %p154 = scmp.eq.s32.totalorder %s18, 1
      %p155 = scmp.ne.s32.totalorder %s150, %s152
      %p156 = scmp.eq.s32.totalorder %s18, 0
      %p157 = por %p155, %p156
      %p158 = scmp.ne.s32.totalorder %s150, %s152
      %p159 = scmp.eq.s32.totalorder %s23, 1
      %p160 = por %p158, %p159
      %p161 = scmp.ne.s32.totalorder %s152, %s153
      %p162 = scmp.eq.s32.totalorder %s23, 0
      %p163 = por %p161, %p162
      %p164 = scmp.ne.s32.totalorder %s152, %s153
      %p165 = scmp.eq.s32.totalorder %s24, 1
      %p166 = por %p164, %p165
      %p168 = scmp.ne.s32.totalorder %s153, %s167
      %p169 = scmp.eq.s32.totalorder %s24, 0
      %p170 = por %p168, %p169
      %s172 = sadd.s32 %s171, 1
      %p175 = scmp.eq.s32.totalorder %s18, 1
      %p176 = scmp.ne.s32.totalorder %s171, %s173
      %p177 = scmp.eq.s32.totalorder %s18, 0
      %p178 = por %p176, %p177
      %p179 = scmp.ne.s32.totalorder %s171, %s173
      %p180 = scmp.eq.s32.totalorder %s23, 1
      %p181 = por %p179, %p180
      %p182 = scmp.ne.s32.totalorder %s173, %s174
      %p183 = scmp.eq.s32.totalorder %s23, 0
      %p184 = por %p182, %p183
      %p185 = scmp.ne.s32.totalorder %s173, %s174
      %p186 = scmp.eq.s32.totalorder %s24, 1
      %p187 = por %p185, %p186
      %p189 = scmp.ne.s32.totalorder %s174, %s188
      %p190 = scmp.eq.s32.totalorder %s24, 0
      %p191 = por %p189, %p190
      %s193 = sadd.s32 %s192, 1
      %p196 = scmp.eq.s32.totalorder %s18, 1
      %p197 = scmp.ne.s32.totalorder %s192, %s194
      %p198 = scmp.eq.s32.totalorder %s18, 0
      %p199 = por %p197, %p198
      %p200 = scmp.ne.s32.totalorder %s192, %s194
      %p201 = scmp.eq.s32.totalorder %s23, 1
      %p202 = por %p200, %p201
      %p203 = scmp.ne.s32.totalorder %s194, %s195
      %p204 = scmp.eq.s32.totalorder %s23, 0
      %p205 = por %p203, %p204
      %p206 = scmp.ne.s32.totalorder %s194, %s195
      %p207 = scmp.eq.s32.totalorder %s24, 1
      %p208 = por %p206, %p207
      %p210 = scmp.ne.s32.totalorder %s195, %s209
      %p211 = scmp.eq.s32.totalorder %s24, 0
      %p212 = por %p210, %p211
      %s214 = sadd.s32 %s213, 1
      %p217 = scmp.eq.s32.totalorder %s18, 1
      %p218 = scmp.ne.s32.totalorder %s213, %s215
      %p219 = scmp.eq.s32.totalorder %s18, 0
      %p220 = por %p218, %p219
      %p221 = scmp.ne.s32.totalorder %s213, %s215
      %p222 = scmp.eq.s32.totalorder %s23, 1
      %p223 = por %p221, %p222
      %p224 = scmp.ne.s32.totalorder %s215, %s216
      %p225 = scmp.eq.s32.totalorder %s23, 0
      %p226 = por %p224, %p225
      %p227 = scmp.ne.s32.totalorder %s215, %s216
      %p228 = scmp.eq.s32.totalorder %s24, 1
      %p229 = por %p227, %p228
      %p231 = scmp.ne.s32.totalorder %s216, %s230
      %p232 = scmp.eq.s32.totalorder %s24, 0
      %p233 = por %p231, %p232
      %p234 = scmp.le.s32.totalorder 1, %s18
      %p235 = scmp.lt.s32.totalorder %s18, 3
      %p236 = pnand %p234, %p235
      %p237 = pneg %p236
      // Predicated region
      $region9: #{tpu_custom_call.1} parent=5 // pred_check
        _
      $region10: #{tpu_custom_call.1} parent=5 // pred_check_branch
        %239 = sbr.rel (%p236) target = $region12
      $region11: #{tpu_custom_call.1} parent=5 // pred_region
        %s240 = ssub.s32 %s18, 1
        // Predicated region
        $region13: #{tpu_custom_call.1} parent=11 // pred_check
          %p241 = pneg %p79
        $region14: #{tpu_custom_call.1} parent=11 // pred_check_branch
          %243 = sbr.rel (%p241) target = $region16
        $region15: #{tpu_custom_call.1} parent=11 // pred_region
          _
        $region16: #{tpu_custom_call.1} parent=11 // pred_fallthru
          _
        // Predicated region
        $region17: #{tpu_custom_call.1} parent=11 // pred_check
          %p244 = pneg %p100
        $region18: #{tpu_custom_call.1} parent=11 // pred_check_branch
          %246 = sbr.rel (%p244) target = $region20
        $region19: #{tpu_custom_call.1} parent=11 // pred_region
          _
        $region20: #{tpu_custom_call.1} parent=11 // pred_fallthru
          _
        // Predicated region
        $region21: #{tpu_custom_call.1} parent=11 // pred_check
          %p247 = pneg %p121
        $region22: #{tpu_custom_call.1} parent=11 // pred_check_branch
          %249 = sbr.rel (%p247) target = $region24
        $region23: #{tpu_custom_call.1} parent=11 // pred_region
          _
        $region24: #{tpu_custom_call.1} parent=11 // pred_fallthru
          _
        // Predicated region
        $region25: #{tpu_custom_call.1} parent=11 // pred_check
          %p250 = pneg %p142
        $region26: #{tpu_custom_call.1} parent=11 // pred_check_branch
          %252 = sbr.rel (%p250) target = $region28
        $region27: #{tpu_custom_call.1} parent=11 // pred_region
          _
        $region28: #{tpu_custom_call.1} parent=11 // pred_fallthru
          _
      $region12: #{tpu_custom_call.1} parent=5 // pred_fallthru
        _
      %p253 = scmp.lt.s32.totalorder %s18, 2
      // Predicated region
      $region29: #{tpu_custom_call.1} parent=5 // pred_check
        %p254 = pneg %p253
      $region30: #{tpu_custom_call.1} parent=5 // pred_check_branch
        %256 = sbr.rel (%p254) target = $region32
      $region31: #{tpu_custom_call.1} parent=5 // pred_region
        // Predicated region
        $region33: #{tpu_custom_call.1} parent=31 // pred_check
          %p257 = pneg %p52
        $region34: #{tpu_custom_call.1} parent=31 // pred_check_branch
          %259 = sbr.rel (%p257) target = $region36
        $region35: #{tpu_custom_call.1} parent=31 // pred_region
          %s260 = sand.u32 %s42, 1
          %s261 = scalar_lea.sflag [#allocation5], %s260
          %s262 = sand.u32 %s42, 1
          %s263 = smul.addr %s262, 8
          %s264 = scalar_lea.vmem [#allocation4], %s263
          %s265 = smul.u32 2, %s26
          %267 = vsyncadd %s261, 0
          %s268 = smul.addr %s25, 2
          %s269 = sadd.s32 %s265, %s268
          %s270 = smul.addr %s269, 4
          %s271 = scalar_lea.hbm %s0, %s270
          %s273 = sshll.u32 %s271, 4
          %s274 = int_to_ptr.hbm [resolvable:$true] %s273
          %s275 = sshll.u32 %s264, 4
          %s276 = int_to_ptr.vmem [resolvable:$true] %s275
          %278 = dma.hbm_to_vmem [thread:$0]  %s274, 128, %s276, %s261
        $region36: #{tpu_custom_call.1} parent=31 // pred_fallthru
          _
      $region32: #{tpu_custom_call.1} parent=5 // pred_fallthru
        _
      %p279 = scmp.le.s32.totalorder 1, %s18
      %p280 = scmp.lt.s32.totalorder %s18, 3
      %p281 = pnand %p279, %p280
      %p282 = pneg %p281
      // Predicated region
      $region37: #{tpu_custom_call.1} parent=5 // pred_check
        _
      $region38: #{tpu_custom_call.1} parent=5 // pred_check_branch
        %284 = sbr.rel (%p281) target = $region40
      $region39: #{tpu_custom_call.1} parent=5 // pred_region
        %s285 = ssub.s32 %s18, 1
        %s286 = sand.u32 %s45, 1
        %s287 = scalar_lea.sflag [#allocation5], %s286
        %s288 = sand.u32 %s45, 1
        %s289 = smul.addr %s288, 8
        %s290 = scalar_lea.vmem [#allocation4], %s289
        // Predicated region
        $region41: #{tpu_custom_call.1} parent=39 // pred_check
          %p291 = pneg %p58
        $region42: #{tpu_custom_call.1} parent=39 // pred_check_branch
          %293 = sbr.rel (%p291) target = $region44
        $region43: #{tpu_custom_call.1} parent=39 // pred_region
          %295 = dma.done %s287, 128
        $region44: #{tpu_custom_call.1} parent=39 // pred_fallthru
          _
        %s296 = sand.u32 %s45, 1
        %s297 = scalar_lea.sflag [#allocation5], %s296
        %s298 = sand.u32 %s45, 1
        %s299 = smul.addr %s298, 8
        %s300 = scalar_lea.vmem [#allocation4], %s299
        %p301 = pneg %p58
        %p302 = pneg %p55
        %p303 = pneg %p79
        %p304 = pneg %p76
        %p305 = pneg %p100
        %p306 = pneg %p97
        %p307 = pneg %p121
        %p308 = pneg %p118
        %p309 = pneg %p142
        %p310 = pneg %p139
        %p311 = pneg %p163
        %p312 = pneg %p160
        %p313 = pneg %p184
        %p314 = pneg %p181
        %p315 = pneg %p205
        %p316 = pneg %p202
        %p317 = pneg %p226
        %p318 = pneg %p223
        %s319 = smul.u32 2, %s28
        %p320 = scmp.eq.s32.totalorder %s27, 0
        %p321 = scmp.eq.s32.totalorder %s28, 0
        %p322 = pnand %p320, %p321
        %p323 = pneg %p322
        // Predicated region
        $region45: #{tpu_custom_call.1} parent=39 // pred_check
          _
        $region46: #{tpu_custom_call.1} parent=39 // pred_check_branch
          %325 = sbr.rel (%p322) target = $region48
        $region47: #{tpu_custom_call.1} parent=39 // pred_region
          %326 = vst [vmem:[#allocation2] sm:$0xff] 0.0
          %327 = vst [vmem:[#allocation3] sm:$0xff] 0.0
        $region48: #{tpu_custom_call.1} parent=39 // pred_fallthru
          _
        %v328 = vld [vmem:[%s290] sm:$0xff]
        %v329 = vld [vmem:[#allocation2] sm:$0xff]
        %v330 = vadd.f32 %v329, %v328
        %331 = vst [vmem:[#allocation2] sm:$0xff] %v330
        %v332 = vld [vmem:[#allocation3] sm:$0xff]
        %v333 = vmul.f32 %v328, %v328
        %v334 = vadd.f32 %v332, %v333
        %335 = vst [vmem:[#allocation3] sm:$0xff] %v334
        %p336 = scmp.eq.s32.totalorder %s27, 1
        %p337 = pnand %p336, %p321
        %p338 = pneg %p337
        // Predicated region
        $region49: #{tpu_custom_call.1} parent=39 // pred_check
          _
        $region50: #{tpu_custom_call.1} parent=39 // pred_check_branch
          %340 = sbr.rel (%p337) target = $region52
        $region51: #{tpu_custom_call.1} parent=39 // pred_region
          %v341 = vld [vmem:[#allocation2] sm:$0xff]
          %343 = vst [vmem:[#allocation1] ss:$2 sm:$0xff] %v341
          %v344 = vld.sshfl [vmem:[#allocation1] sm:$0xff pattern:$0x75316420]
          %v345 = vld.sshfl [vmem:[#allocation1 + $0x8] sm:$0xff pattern:$0x75316420]
          %vm348 = vcmask 1043456
          %v349 = vsel %vm348, %v344, 0.0
          %v350 = vsel %vm348, %v345, 0.0
          %v351 = vadd.f32 %v349, %v350
          %352 = vadd.xlane.f32.xlu0 %v351
          %v353 = vpop.xlane.xlu0 %352
          %v354 = vmul.f32 %v353, 0.001953125
          %v355 = vld [vmem:[#allocation3] sm:$0xff]
          %357 = vst [vmem:[#allocation1] ss:$2 sm:$0xff] %v355
          %v358 = vld.sshfl [vmem:[#allocation1] sm:$0xff pattern:$0x75316420]
          %v359 = vld.sshfl [vmem:[#allocation1 + $0x8] sm:$0xff pattern:$0x75316420]
          %v362 = vsel %vm348, %v358, 0.0
          %v363 = vsel %vm348, %v359, 0.0
          %v364 = vadd.f32 %v362, %v363
          %365 = vadd.xlane.f32.xlu0 %v364
          %v366 = vpop.xlane.xlu0 %365
          %v367 = vmul.f32 %v366, 0.001953125
          %v368 = vmul.f32 %v354, %v354
          %v369 = vsub.f32 %v367, %v368
          %v370 = vadd.f32 %v369, 1e-05
          %v371 = vrsqrt.pop %v370
          %v372 = vmul.f32 %v371, %v370
          %v373 = vmul.f32 %v372, %v371
          %v374 = vmul.f32 0.5, %v373
          %v375 = vsub.f32 1.5, %v374
          %v376 = vmul.f32 %v371, %v375
          %vm377 = vweird.f32 %v370
          %vm378 = vweird.f32 %v371
          %vm379 = vmor %vm377, %vm378
          %v380 = vsel %vm379, %v371, %v376
          %v381 = vld [vmem:[%s1] sm:$0xf]
          %v382 = vmul.f32 %v381, %v380
          %vm383 = vcmask 3072
          %384 = vst.msk [vmem:[%s5] sm:$0xf] %vm383, %v382
          %v385 = vld [vmem:[%s2] sm:$0xf]
          %v386 = vmul.f32 %v354, %v382
          %v387 = vsub.f32 %v385, %v386
          %388 = vst.msk [vmem:[%s6] sm:$0xf] %vm383, %v387
          %v389 = vmul.f32 %v354, 0.99
          %v390 = vld [vmem:[%s3] sm:$0xf]
          %v391 = vmul.f32 %v390, 0.01
          %v392 = vadd.f32 %v389, %v391
          %393 = vst.msk [vmem:[%s7] sm:$0xf] %vm383, %v392
          %v394 = vmul.f32 %v369, 0.99
          %v395 = vld [vmem:[%s4] sm:$0xf]
          %v396 = vmul.f32 %v395, 0.01
          %v397 = vadd.f32 %v394, %v396
          %398 = vst.msk [vmem:[%s8] sm:$0xf] %vm383, %v397
        $region52: #{tpu_custom_call.1} parent=39 // pred_fallthru
          _
        // Predicated region
        $region53: #{tpu_custom_call.1} parent=39 // pred_check
          %p399 = pneg %p160
        $region54: #{tpu_custom_call.1} parent=39 // pred_check_branch
          %401 = sbr.rel (%p399) target = $region56
        $region55: #{tpu_custom_call.1} parent=39 // pred_region
          _
        $region56: #{tpu_custom_call.1} parent=39 // pred_fallthru
          _
        // Predicated region
        $region57: #{tpu_custom_call.1} parent=39 // pred_check
          %p402 = pneg %p181
        $region58: #{tpu_custom_call.1} parent=39 // pred_check_branch
          %404 = sbr.rel (%p402) target = $region60
        $region59: #{tpu_custom_call.1} parent=39 // pred_region
          _
        $region60: #{tpu_custom_call.1} parent=39 // pred_fallthru
          _
        // Predicated region
        $region61: #{tpu_custom_call.1} parent=39 // pred_check
          %p405 = pneg %p202
        $region62: #{tpu_custom_call.1} parent=39 // pred_check_branch
          %407 = sbr.rel (%p405) target = $region64
        $region63: #{tpu_custom_call.1} parent=39 // pred_region
          _
        $region64: #{tpu_custom_call.1} parent=39 // pred_fallthru
          _
        // Predicated region
        $region65: #{tpu_custom_call.1} parent=39 // pred_check
          %p408 = pneg %p223
        $region66: #{tpu_custom_call.1} parent=39 // pred_check_branch
          %410 = sbr.rel (%p408) target = $region68
        $region67: #{tpu_custom_call.1} parent=39 // pred_region
          _
        $region68: #{tpu_custom_call.1} parent=39 // pred_fallthru
          _
        // Predicated region
        $region69: #{tpu_custom_call.1} parent=39 // pred_check
          %p411 = pneg %p160
        $region70: #{tpu_custom_call.1} parent=39 // pred_check_branch
          %413 = sbr.rel (%p411) target = $region72
        $region71: #{tpu_custom_call.1} parent=39 // pred_region
          _
        $region72: #{tpu_custom_call.1} parent=39 // pred_fallthru
          _
        // Predicated region
        $region73: #{tpu_custom_call.1} parent=39 // pred_check
          %p414 = pneg %p181
        $region74: #{tpu_custom_call.1} parent=39 // pred_check_branch
          %416 = sbr.rel (%p414) target = $region76
        $region75: #{tpu_custom_call.1} parent=39 // pred_region
          _
        $region76: #{tpu_custom_call.1} parent=39 // pred_fallthru
          _
        // Predicated region
        $region77: #{tpu_custom_call.1} parent=39 // pred_check
          %p417 = pneg %p202
        $region78: #{tpu_custom_call.1} parent=39 // pred_check_branch
          %419 = sbr.rel (%p417) target = $region80
        $region79: #{tpu_custom_call.1} parent=39 // pred_region
          _
        $region80: #{tpu_custom_call.1} parent=39 // pred_fallthru
          _
        // Predicated region
        $region81: #{tpu_custom_call.1} parent=39 // pred_check
          %p420 = pneg %p223
        $region82: #{tpu_custom_call.1} parent=39 // pred_check_branch
          %422 = sbr.rel (%p420) target = $region84
        $region83: #{tpu_custom_call.1} parent=39 // pred_region
          _
        $region84: #{tpu_custom_call.1} parent=39 // pred_fallthru
          _
      $region40: #{tpu_custom_call.1} parent=5 // pred_fallthru
        _
      %p423 = scmp.le.s32.totalorder 2, %s18
      // Predicated region
      $region85: #{tpu_custom_call.1} parent=5 // pred_check
        %p424 = pneg %p423
      $region86: #{tpu_custom_call.1} parent=5 // pred_check_branch
        %426 = sbr.rel (%p424) target = $region88
      $region87: #{tpu_custom_call.1} parent=5 // pred_region
        %s427 = ssub.s32 %s18, 2
      $region88: #{tpu_custom_call.1} parent=5 // pred_fallthru
        _
    $region6: #{tpu_custom_call.1} parent=1 // loop_footer
      %s22 = sadd.s32 1, %s18
    $region7: #{tpu_custom_call.1} parent=1 // loop_footer_branch
      %17 = sbr.rel target = $region3
    $region8: #{tpu_custom_call.1} parent=1 // loop_exit
      _
    %428 = vsyncpa [#allocation5], 1
    %s429 = scalar_lea.sflag [#allocation5], 1
    %430 = vsyncpa %s429, 1

</llo_original>
